<compile_context>
chip_gen: v5e
topology: v5e:2x2
jax: 0.10.0
libtpu: 0.0.40
codegen_flags: <defaults>
</compile_context>

<pallas_src>
import functools

import jax
import jax.numpy as jnp
from jax.experimental import pallas as pl
from jax.experimental.pallas import tpu as pltpu

_MIB = 1024 * 1024


def attflat_kernel(x_ref, mask_ref, wm_ref, wl_ref, bl_ref, o_ref, *,
                   approx_recip, mxu_weighted_sum):
    # x_ref:    (BT, S, D)  batch tile, streamed dtype (f32 or bf16)
    # mask_ref: (BT, S)     f32, >0 = keep
    # wm_ref:   (1, D)      mlp weight, streamed dtype
    # wl_ref:   (D, D)      linear_merge weight (pre-transposed), streamed dtype
    # bl_ref:   (1, D)      linear_merge bias, f32
    # o_ref:    (BT, D)
    bt, s, d = x_ref.shape
    x = x_ref[...]                                     # streamed dtype
    mask = mask_ref[...]                               # (BT, S) f32
    wm = wm_ref[...]                                   # (1, D) streamed dtype

    # att = self.mlp(x): lane-dense logits (BT, S).  Multiply in the streamed
    # dtype, accumulate/convert in f32.  (mlp bias omitted: softmax is
    # shift-invariant, so it cannot change the result.)
    att = jnp.sum((x * wm).astype(jnp.float32), axis=-1)          # (BT, S)

    # torch.where(x_mask > 0, att, -1e9)
    att = jnp.where(mask > 0.0, att, jnp.full_like(att, -1.0e9))

    # softmax over the sequence axis (lane axis => lane reduces), f32.
    m = jnp.max(att, axis=-1, keepdims=True)                      # (BT, 1)
    e = jnp.exp(att - m)
    denom = jnp.sum(e, axis=-1, keepdims=True)                    # (BT, 1)
    p = e * pl.reciprocal(denom, approx=approx_recip)             # (BT, S)

    # x_atted[b, d] = sum_s p[b, s] * x[b, s, d]  -> (BT, D), f32 accumulation.
    if mxu_weighted_sum:
        # Batched contraction on the MXU (same pattern as the flash-attention
        # pv matmul with a q-tile of 1); avoids the (BT,S,D) lane broadcast.
        p3 = p.astype(x.dtype).reshape(bt, 1, s)
        x_att = jnp.einsum("bqs,bsd->bqd", p3, x,
                           preferred_element_type=jnp.float32).reshape(bt, d)
    else:
        # VPU fallback: multiply in the streamed dtype, accumulate in f32.
        x_att = jnp.sum((p[:, :, None].astype(x.dtype) * x).astype(jnp.float32),
                        axis=1)

    # x_atted = self.linear_merge(x_atted): (BT, D) @ (D, D) on the MXU.
    wl = wl_ref[...]
    out = jnp.dot(x_att.astype(wl.dtype), wl,
                  preferred_element_type=jnp.float32) + bl_ref[...]
    o_ref[...] = out.astype(o_ref.dtype)


def _tpu_vmem_capacity_bytes():
    try:
        return int(pltpu.get_tpu_info().vmem_capacity_bytes)
    except Exception:
        return 64 * _MIB  # conservative (v7x-sized) fallback


def _num_tensorcores():
    for get in (lambda: getattr(jax.local_devices()[0], "num_cores", None),
                lambda: getattr(pltpu.get_tpu_info(), "num_cores", None)):
        try:
            n = get()
        except Exception:
            n = None
        if n:
            return max(1, int(n))
    return 1


def _pick_b_tile(B, S, D, x_itemsize, vmem_budget_bytes, min_steps, row_align):
    """Largest batch tile that fits the VMEM budget (cap 512)."""
    # Resident weights: Pallas double-buffers blocks even with a constant
    # index_map, so charge two copies of wm/wl + the f32 merge bias.
    weight_bytes = 2 * (D * D + D) * x_itemsize + 2 * D * 4
    # Streamed per batch row, double-buffered: x block + mask + output.
    stream_row = 2 * (S * D * x_itemsize + S * 4 + D * 4)
    # In-kernel temporaries per row (single copy): the x*wm product in the
    # streamed dtype + its f32 conversion feeding the reduce, softmax
    # intermediates, the sublane-padded (1,S) probability slab and x_atted.
    temp_row = S * D * (x_itemsize + 4) + 64 * S + 16 * D
    per_row = stream_row + temp_row
    avail = max(vmem_budget_bytes - weight_bytes, per_row)
    bt = int(min(B, avail // per_row, 512))
    # Keep >= min_steps grid steps (DMA overlap / one per TensorCore), as
    # long as the tile stays at least one sublane-aligned block.
    if min_steps > 1:
        bt = min(bt, max(row_align, -(-B // min_steps)))
    if bt < B and bt >= row_align:
        bt = (bt // row_align) * row_align  # dense (unmasked) output stores
    return max(1, min(bt, B))


def attflat(x, x_mask, w_mlp, b_mlp, w_merge, b_merge, *,
            compute_dtype=None, b_tile=None, vmem_budget_bytes=None,
            approx_recip=False):
    """AttFlat forward.  x: (B, S, D); x_mask: (B, S) or None.
    Weights in PyTorch nn.Linear layout: w_mlp (1, D), b_mlp (1,),
    w_merge (D, D), b_merge (D,).
    compute_dtype=jnp.bfloat16 streams x / weights in bf16 (f32 accum)."""
    B, S, D = x.shape
    out_dtype = x.dtype
    if compute_dtype is None:
        compute_dtype = x.dtype
    compute_dtype = jnp.dtype(compute_dtype)

    if x_mask is None:
        mask = jnp.ones((B, S), dtype=jnp.float32)
    else:
        mask = jnp.asarray(x_mask).astype(jnp.float32)

    x_c = x.astype(compute_dtype)                               # streamed tile data
    wm = jnp.asarray(w_mlp).reshape(1, D).astype(compute_dtype)
    del b_mlp  # softmax(att + c) == softmax(att): the mlp bias is a no-op.
    wl = jnp.asarray(w_merge).T.astype(compute_dtype)           # (D, D): y = x @ W.T + b
    bl = jnp.asarray(b_merge).reshape(1, D).astype(jnp.float32)

    vmem_cap = _tpu_vmem_capacity_bytes()
    if vmem_budget_bytes is None:
        vmem_budget_bytes = int(0.70 * vmem_cap)
    vmem_limit = int(min(vmem_cap, vmem_budget_bytes + 8 * _MIB))

    row_align = 16 if (jnp.dtype(out_dtype).itemsize < 4
                       or compute_dtype.itemsize < 4) else 8
    min_steps = 3 * _num_tensorcores()
    if b_tile is None:
        b_tile = _pick_b_tile(B, S, D, compute_dtype.itemsize,
                              vmem_budget_bytes, min_steps, row_align)
    num_blocks = -(-B // b_tile)
    B_pad = num_blocks * b_tile
    if B_pad != B:
        x_c = jnp.pad(x_c, ((0, B_pad - B), (0, 0), (0, 0)))
        # pad mask with "keep" so padded rows stay NaN-free (outputs discarded)
        mask = jnp.pad(mask, ((0, B_pad - B), (0, 0)), constant_values=1.0)

    def build(mxu_weighted_sum):
        kernel = functools.partial(attflat_kernel,
                                   approx_recip=approx_recip,
                                   mxu_weighted_sum=mxu_weighted_sum)
        grid_spec = pltpu.PrefetchScalarGridSpec(
            num_scalar_prefetch=0,
            grid=(num_blocks,),
            in_specs=[
                pl.BlockSpec((b_tile, S, D), lambda i: (i, 0, 0)),  # x tile
                pl.BlockSpec((b_tile, S), lambda i: (i, 0)),        # mask tile
                pl.BlockSpec((1, D), lambda i: (0, 0)),             # mlp weight (resident)
                pl.BlockSpec((D, D), lambda i: (0, 0)),             # merge weight (resident)
                pl.BlockSpec((1, D), lambda i: (0, 0)),             # merge bias (resident)
            ],
            out_specs=pl.BlockSpec((b_tile, D), lambda i: (i, 0)),
        )
        return pl.pallas_call(
            kernel,
            out_shape=jax.ShapeDtypeStruct((B_pad, D), out_dtype),
            grid_spec=grid_spec,
            compiler_params=pltpu.CompilerParams(
                dimension_semantics=("parallel",),
                vmem_limit_bytes=vmem_limit),
        )

    try:
        out = build(True)(x_c, mask, wm, wl, bl)
    except Exception:
        # Safety net: if the batched (M=1) MXU contraction fails to lower on
        # this backend, fall back to the VPU broadcast-multiply formulation.
        out = build(False)(x_c, mask, wm, wl, bl)
    return out[:B]


def attflat_ref(x, x_mask, w_mlp, b_mlp, w_merge, b_merge):
    """Pure-JAX reference matching the PyTorch forward (incl. mlp bias)."""
    att = jnp.einsum("bsd,od->bso", x, w_mlp) + b_mlp           # (B, S, 1)
    if x_mask is not None:
        att = jnp.where(x_mask[..., None] > 0, att, -1.0e9)
    att = jax.nn.softmax(att, axis=1)
    x_atted = jnp.sum(att * x, axis=1)                          # (B, D)
    return x_atted @ w_merge.T + b_merge


if __name__ == "__main__":
    B, S, D = 2, 8, 32
    key = jax.random.PRNGKey(0)
    kx, kmask, k1, k2, k3, k4 = jax.random.split(key, 6)

    x = jax.random.normal(kx, (B, S, D), dtype=jnp.float32)
    # mask: 1.0 = keep, 0.0 = masked
    x_mask = (jax.random.uniform(kmask, (B, S)) > 0.25).astype(jnp.float32)

    # Deterministic "nn.Linear"-style params.
    w_mlp = 0.1 * jax.random.normal(k1, (1, D), dtype=jnp.float32)
    b_mlp = 0.1 * jax.random.normal(k2, (1,), dtype=jnp.float32)
    w_merge = 0.1 * jax.random.normal(k3, (D, D), dtype=jnp.float32)
    b_merge = 0.1 * jax.random.normal(k4, (D,), dtype=jnp.float32)

    ref = attflat_ref(x, x_mask, w_mlp, b_mlp, w_merge, b_merge)

    # f32 path: tight tolerance against the reference.
    out_f32 = jax.block_until_ready(
        attflat(x, x_mask, w_mlp, b_mlp, w_merge, b_merge))
    assert out_f32.shape == (B, D)
    assert jnp.allclose(out_f32, ref, atol=1e-4, rtol=1e-4), "f32 mismatch"

    # bf16-streamed path (x / weights / probabilities in bf16, f32 accum):
    # tolerance relaxed per bf16 precision (~1e-2 relative).
    out_bf16 = jax.block_until_ready(
        attflat(x, x_mask, w_mlp, b_mlp, w_merge, b_merge,
                compute_dtype=jnp.bfloat16))
    assert out_bf16.shape == (B, D)
    assert jnp.allclose(out_bf16.astype(jnp.float32), ref,
                        atol=3e-2, rtol=3e-2), "bf16 mismatch"

    print("KERNEL_OK")
</pallas_src>

<mosaic_0001>
module attributes {stable_mosaic.version = 11 : i64} {
  func.func @attflat_kernel(%arg0: i32, %arg1: memref<2x8x32xf32, #tpu.memory_space<vmem>>, %arg2: memref<2x8xf32, #tpu.memory_space<vmem>>, %arg3: memref<1x32xf32, #tpu.memory_space<vmem>>, %arg4: memref<32x32xf32, #tpu.memory_space<vmem>>, %arg5: memref<1x32xf32, #tpu.memory_space<vmem>>, %arg6: memref<2x32xf32, #tpu.memory_space<vmem>>) attributes {dimension_semantics = [#tpu.dimension_semantics<parallel>], iteration_bounds = array<i64: 1>, scalar_prefetch = 0 : i64, scratch_operands = 0 : i64, tpu.core_type = #tpu.core_type<tc>, window_params = [{transform_indices = @transform_0, window_bounds = array<i64: 2, 8, 32>}, {transform_indices = @transform_1, window_bounds = array<i64: 2, 8>}, {pipeline_mode = #tpu.pipeline_mode<synchronous>, transform_indices = @transform_2, window_bounds = array<i64: 1, 32>}, {pipeline_mode = #tpu.pipeline_mode<synchronous>, transform_indices = @transform_3, window_bounds = array<i64: 32, 32>}, {pipeline_mode = #tpu.pipeline_mode<synchronous>, transform_indices = @transform_4, window_bounds = array<i64: 1, 32>}, {transform_indices = @transform_5, window_bounds = array<i64: 2, 32>}]} {
    %c0 = arith.constant 0 : index
    %c0_0 = arith.constant 0 : index
    %c0_1 = arith.constant 0 : index
    %0 = vector.load %arg1[%c0, %c0_0, %c0_1] : memref<2x8x32xf32, #tpu.memory_space<vmem>>, vector<2x8x32xf32>
    %c0_2 = arith.constant 0 : index
    %c0_3 = arith.constant 0 : index
    %1 = vector.load %arg2[%c0_2, %c0_3] : memref<2x8xf32, #tpu.memory_space<vmem>>, vector<2x8xf32>
    %c0_4 = arith.constant 0 : index
    %c0_5 = arith.constant 0 : index
    %2 = vector.load %arg3[%c0_4, %c0_5] : memref<1x32xf32, #tpu.memory_space<vmem>>, vector<1x32xf32>
    %3 = vector.shape_cast %2 : vector<1x32xf32> to vector<1x1x32xf32>
    %4 = vector.broadcast %3 : vector<1x1x32xf32> to vector<2x8x32xf32>
    %5 = arith.mulf %0, %4 : vector<2x8x32xf32>
    %cst = arith.constant dense<0.000000e+00> : vector<2x8xf32>
    %6 = vector.multi_reduction <add>, %5, %cst [2] : vector<2x8x32xf32> to vector<2x8xf32>
    %cst_6 = arith.constant 0.000000e+00 : f32
    %7 = vector.broadcast %cst_6 : f32 to vector<2x8xf32>
    %8 = arith.cmpf ogt, %1, %7 : vector<2x8xf32>
    %cst_7 = arith.constant -1.000000e+09 : f32
    %9 = vector.broadcast %cst_7 : f32 to vector<2x8xf32>
    %10 = arith.select %8, %6, %9 : vector<2x8xi1>, vector<2x8xf32>
    %cst_8 = arith.constant dense<0xFF800000> : vector<2xf32>
    %11 = vector.multi_reduction <maximumf>, %10, %cst_8 [1] : vector<2x8xf32> to vector<2xf32>
    %12 = vector.shape_cast %11 : vector<2xf32> to vector<2x1xf32>
    %13 = vector.broadcast %12 : vector<2x1xf32> to vector<2x8xf32>
    %14 = arith.subf %10, %13 : vector<2x8xf32>
    %15 = math.exp %14 : vector<2x8xf32>
    %cst_9 = arith.constant dense<0.000000e+00> : vector<2xf32>
    %16 = vector.multi_reduction <add>, %15, %cst_9 [1] : vector<2x8xf32> to vector<2xf32>
    %17 = vector.shape_cast %16 : vector<2xf32> to vector<2x1xf32>
    %18 = tpu.reciprocal %17 : vector<2x1xf32> -> vector<2x1xf32>
    %19 = vector.broadcast %18 : vector<2x1xf32> to vector<2x8xf32>
    %20 = arith.mulf %15, %19 : vector<2x8xf32>
    %21 = vector.shape_cast %20 : vector<2x8xf32> to vector<2x1x8xf32>
    "tpu.trace_start"() <{level = 10 : i32, message = "bqs,bsd->bqd"}> : () -> ()
    %cst_10 = arith.constant dense<0.000000e+00> : vector<2x1x32xf32>
    %22 = tpu.matmul %21, %0, %cst_10 {dimension_numbers = #tpu.dot_dimension_numbers<[2], [1], [1], [2], [0, 0, 0, 1, 1, 2], [0], [0]>} : vector<2x1x8xf32>, vector<2x8x32xf32>, vector<2x1x32xf32> -> vector<2x1x32xf32>
    "tpu.trace_stop"() : () -> ()
    %23 = vector.shape_cast %22 : vector<2x1x32xf32> to vector<2x32xf32>
    %c0_11 = arith.constant 0 : index
    %c0_12 = arith.constant 0 : index
    %24 = vector.load %arg4[%c0_11, %c0_12] : memref<32x32xf32, #tpu.memory_space<vmem>>, vector<32x32xf32>
    %cst_13 = arith.constant dense<0.000000e+00> : vector<2x32xf32>
    %25 = tpu.matmul %23, %24, %cst_13 {dimension_numbers = #tpu.dot_dimension_numbers<[1], [0], [0], [1], [0, 0, 1, 1], [], []>} : vector<2x32xf32>, vector<32x32xf32>, vector<2x32xf32> -> vector<2x32xf32>
    %c0_14 = arith.constant 0 : index
    %c0_15 = arith.constant 0 : index
    %26 = vector.load %arg5[%c0_14, %c0_15] : memref<1x32xf32, #tpu.memory_space<vmem>>, vector<1x32xf32>
    %27 = vector.broadcast %26 : vector<1x32xf32> to vector<2x32xf32>
    %28 = arith.addf %25, %27 : vector<2x32xf32>
    %c0_16 = arith.constant 0 : index
    %c0_17 = arith.constant 0 : index
    %29 = vector.load %arg6[%c0_16, %c0_17] : memref<2x32xf32, #tpu.memory_space<vmem>>, vector<2x32xf32>
    tpu.vector_store %arg6[%c0_16, %c0_17], %28 {strides = array<i32>} : memref<2x32xf32, #tpu.memory_space<vmem>>, vector<2x32xf32>,
    return
  }
  func.func @transform_0(%arg0: i32) -> (i32, i32, i32) {
    %c0_i32 = arith.constant 0 : i32
    %c0_i32_0 = arith.constant 0 : i32
    %c0_i32_1 = arith.constant 0 : i32
    return %arg0, %c0_i32, %c0_i32_0 : i32, i32, i32
  }
  func.func @transform_1(%arg0: i32) -> (i32, i32) {
    %c0_i32 = arith.constant 0 : i32
    %c0_i32_0 = arith.constant 0 : i32
    return %arg0, %c0_i32 : i32, i32
  }
  func.func @transform_2(%arg0: i32) -> (i32, i32) {
    %c0_i32 = arith.constant 0 : i32
    %c0_i32_0 = arith.constant 0 : i32
    %c0_i32_1 = arith.constant 0 : i32
    return %c0_i32, %c0_i32_0 : i32, i32
  }
  func.func @transform_3(%arg0: i32) -> (i32, i32) {
    %c0_i32 = arith.constant 0 : i32
    %c0_i32_0 = arith.constant 0 : i32
    %c0_i32_1 = arith.constant 0 : i32
    return %c0_i32, %c0_i32_0 : i32, i32
  }
  func.func @transform_4(%arg0: i32) -> (i32, i32) {
    %c0_i32 = arith.constant 0 : i32
    %c0_i32_0 = arith.constant 0 : i32
    %c0_i32_1 = arith.constant 0 : i32
    return %c0_i32, %c0_i32_0 : i32, i32
  }
  func.func @transform_5(%arg0: i32) -> (i32, i32) {
    %c0_i32 = arith.constant 0 : i32
    %c0_i32_0 = arith.constant 0 : i32
    return %arg0, %c0_i32 : i32, i32
  }
}

module attributes {stable_mosaic.version = 11 : i64} {
  func.func @attflat_kernel(%arg0: i32, %arg1: memref<2x8x32xf32, #tpu.memory_space<vmem>>, %arg2: memref<2x8xf32, #tpu.memory_space<vmem>>, %arg3: memref<1x32xf32, #tpu.memory_space<vmem>>, %arg4: memref<32x32xf32, #tpu.memory_space<vmem>>, %arg5: memref<1x32xf32, #tpu.memory_space<vmem>>, %arg6: memref<2x32xf32, #tpu.memory_space<vmem>>) attributes {dimension_semantics = [#tpu.dimension_semantics<parallel>], iteration_bounds = array<i64: 1>, scalar_prefetch = 0 : i64, scratch_operands = 0 : i64, tpu.core_type = #tpu.core_type<tc>, window_params = [{transform_indices = @transform_0, window_bounds = array<i64: 2, 8, 32>}, {transform_indices = @transform_1, window_bounds = array<i64: 2, 8>}, {pipeline_mode = #tpu.pipeline_mode<synchronous>, transform_indices = @transform_2, window_bounds = array<i64: 1, 32>}, {pipeline_mode = #tpu.pipeline_mode<synchronous>, transform_indices = @transform_3, window_bounds = array<i64: 32, 32>}, {pipeline_mode = #tpu.pipeline_mode<synchronous>, transform_indices = @transform_4, window_bounds = array<i64: 1, 32>}, {transform_indices = @transform_5, window_bounds = array<i64: 2, 32>}]} {
    %c0 = arith.constant 0 : index
    %c0_0 = arith.constant 0 : index
    %c0_1 = arith.constant 0 : index
    %0 = vector.load %arg1[%c0, %c0_0, %c0_1] : memref<2x8x32xf32, #tpu.memory_space<vmem>>, vector<2x8x32xf32>
    %c0_2 = arith.constant 0 : index
    %c0_3 = arith.constant 0 : index
    %1 = vector.load %arg2[%c0_2, %c0_3] : memref<2x8xf32, #tpu.memory_space<vmem>>, vector<2x8xf32>
    %c0_4 = arith.constant 0 : index
    %c0_5 = arith.constant 0 : index
    %2 = vector.load %arg3[%c0_4, %c0_5] : memref<1x32xf32, #tpu.memory_space<vmem>>, vector<1x32xf32>
    %3 = vector.shape_cast %2 : vector<1x32xf32> to vector<1x1x32xf32>
    %4 = vector.broadcast %3 : vector<1x1x32xf32> to vector<2x8x32xf32>
    %5 = arith.mulf %0, %4 : vector<2x8x32xf32>
    %cst = arith.constant dense<0.000000e+00> : vector<2x8xf32>
    %6 = vector.multi_reduction <add>, %5, %cst [2] : vector<2x8x32xf32> to vector<2x8xf32>
    %cst_6 = arith.constant 0.000000e+00 : f32
    %7 = vector.broadcast %cst_6 : f32 to vector<2x8xf32>
    %8 = arith.cmpf ogt, %1, %7 : vector<2x8xf32>
    %cst_7 = arith.constant -1.000000e+09 : f32
    %9 = vector.broadcast %cst_7 : f32 to vector<2x8xf32>
    %10 = arith.select %8, %6, %9 : vector<2x8xi1>, vector<2x8xf32>
    %cst_8 = arith.constant dense<0xFF800000> : vector<2xf32>
    %11 = vector.multi_reduction <maximumf>, %10, %cst_8 [1] : vector<2x8xf32> to vector<2xf32>
    %12 = vector.shape_cast %11 : vector<2xf32> to vector<2x1xf32>
    %13 = vector.broadcast %12 : vector<2x1xf32> to vector<2x8xf32>
    %14 = arith.subf %10, %13 : vector<2x8xf32>
    %15 = math.exp %14 : vector<2x8xf32>
    %cst_9 = arith.constant dense<0.000000e+00> : vector<2xf32>
    %16 = vector.multi_reduction <add>, %15, %cst_9 [1] : vector<2x8xf32> to vector<2xf32>
    %17 = vector.shape_cast %16 : vector<2xf32> to vector<2x1xf32>
    %18 = tpu.reciprocal %17 : vector<2x1xf32> -> vector<2x1xf32>
    %19 = vector.broadcast %18 : vector<2x1xf32> to vector<2x8xf32>
    %20 = arith.mulf %15, %19 : vector<2x8xf32>
    %21 = vector.shape_cast %20 : vector<2x8xf32> to vector<2x8x1xf32>
    %22 = vector.broadcast %21 : vector<2x8x1xf32> to vector<2x8x32xf32>
    %23 = arith.mulf %22, %0 : vector<2x8x32xf32>
    %cst_10 = arith.constant dense<0.000000e+00> : vector<2x32xf32>
    %24 = vector.multi_reduction <add>, %23, %cst_10 [1] : vector<2x8x32xf32> to vector<2x32xf32>
    %c0_11 = arith.constant 0 : index
    %c0_12 = arith.constant 0 : index
    %25 = vector.load %arg4[%c0_11, %c0_12] : memref<32x32xf32, #tpu.memory_space<vmem>>, vector<32x32xf32>
    %cst_13 = arith.constant dense<0.000000e+00> : vector<2x32xf32>
    %26 = tpu.matmul %24, %25, %cst_13 {dimension_numbers = #tpu.dot_dimension_numbers<[1], [0], [0], [1], [0, 0, 1, 1], [], []>} : vector<2x32xf32>, vector<32x32xf32>, vector<2x32xf32> -> vector<2x32xf32>
    %c0_14 = arith.constant 0 : index
    %c0_15 = arith.constant 0 : index
    %27 = vector.load %arg5[%c0_14, %c0_15] : memref<1x32xf32, #tpu.memory_space<vmem>>, vector<1x32xf32>
    %28 = vector.broadcast %27 : vector<1x32xf32> to vector<2x32xf32>
    %29 = arith.addf %26, %28 : vector<2x32xf32>
    %c0_16 = arith.constant 0 : index
    %c0_17 = arith.constant 0 : index
    %30 = vector.load %arg6[%c0_16, %c0_17] : memref<2x32xf32, #tpu.memory_space<vmem>>, vector<2x32xf32>
    tpu.vector_store %arg6[%c0_16, %c0_17], %29 {strides = array<i32>} : memref<2x32xf32, #tpu.memory_space<vmem>>, vector<2x32xf32>,
    return
  }
  func.func @transform_0(%arg0: i32) -> (i32, i32, i32) {
    %c0_i32 = arith.constant 0 : i32
    %c0_i32_0 = arith.constant 0 : i32
    %c0_i32_1 = arith.constant 0 : i32
    return %arg0, %c0_i32, %c0_i32_0 : i32, i32, i32
  }
  func.func @transform_1(%arg0: i32) -> (i32, i32) {
    %c0_i32 = arith.constant 0 : i32
    %c0_i32_0 = arith.constant 0 : i32
    return %arg0, %c0_i32 : i32, i32
  }
  func.func @transform_2(%arg0: i32) -> (i32, i32) {
    %c0_i32 = arith.constant 0 : i32
    %c0_i32_0 = arith.constant 0 : i32
    %c0_i32_1 = arith.constant 0 : i32
    return %c0_i32, %c0_i32_0 : i32, i32
  }
  func.func @transform_3(%arg0: i32) -> (i32, i32) {
    %c0_i32 = arith.constant 0 : i32
    %c0_i32_0 = arith.constant 0 : i32
    %c0_i32_1 = arith.constant 0 : i32
    return %c0_i32, %c0_i32_0 : i32, i32
  }
  func.func @transform_4(%arg0: i32) -> (i32, i32) {
    %c0_i32 = arith.constant 0 : i32
    %c0_i32_0 = arith.constant 0 : i32
    %c0_i32_1 = arith.constant 0 : i32
    return %c0_i32, %c0_i32_0 : i32, i32
  }
  func.func @transform_5(%arg0: i32) -> (i32, i32) {
    %c0_i32 = arith.constant 0 : i32
    %c0_i32_0 = arith.constant 0 : i32
    return %arg0, %c0_i32 : i32, i32
  }
}

</mosaic_0001>

<llo_original>
// kernel: tpu_custom_call.1
$region0: #{tpu_custom_call.1}
  #allocation0 [shape = 'u32[]', space=smem, size = 0x4, offset = 0x4, fixed_abs, tag = 'smem constant byte address 0x4 - core index']
  #allocation1 [shape = 'u32[72,128]{1,0:T(1,128)}', space=vmem, size = 0x9000, scoped, tag = 'internal scratch']
  %s0 = inlined_call_operand.hbm [shape: f32[2,8,32], index: 0, kind: input, shape index: {}]
  %s1 = inlined_call_operand.hbm [shape: f32[2,8], index: 1, kind: input, shape index: {}]
  %s2 = inlined_call_operand.vmem [shape: f32[1,32], index: 2, kind: input, shape index: {}]
  %s3 = inlined_call_operand.hbm [shape: f32[32,32], index: 3, kind: input, shape index: {}]
  %s4 = inlined_call_operand.vmem [shape: f32[1,32], index: 4, kind: input, shape index: {}]
  %s5 = inlined_call_operand.hbm [shape: f32[2,32], index: 5, kind: output, shape index: {}]
  %s6 = sld [smem:[#allocation0]]
  $region42: #{tpu_custom_call.1} parent=0
    _
  %s8 = ssub.s32 1, %s6
  %s9 = scalar_select 0, %s8, %s6
  $region1: #{tpu_custom_call.1} parent=0
    #allocation2 [shape = 'u8[8192]{0}', space=vmem, size = 0x2000, scoped, tag = 'input window, operand 0, single buffered']
    #allocation3 [shape = 's32[1]{0}', space=sflag, size = 0x4, scoped, tag = 'scoped memory for tpu_custom_call.1']
    #allocation4 [shape = 's32[1]{0}', space=sflag, size = 0x4, scoped, tag = 'scoped memory for tpu_custom_call.1']
    #allocation5 [shape = 'u8[1024]{0}', space=vmem, size = 0x400, scoped, tag = 'input window, operand 1, single buffered']
    #allocation6 [shape = 's32[1]{0}', space=sflag, size = 0x4, scoped, tag = 'scoped memory for tpu_custom_call.1']
    #allocation7 [shape = 'u8[16384]{0}', space=vmem, size = 0x4000, scoped, tag = 'input window, operand 3, single buffered']
    #allocation8 [shape = 'u8[1024]{0}', space=vmem, size = 0x400, scoped, tag = 'output window, operand 0, single buffered']
    %10 = vsyncpa [#allocation3], 0
    %11 = vsyncpa [#allocation6], 0
    %12 = vsyncpa [#allocation4], 0
    // Predicated region
    $region2: #{tpu_custom_call.1} parent=1 // pred_check
      _
    $region3: #{tpu_custom_call.1} parent=1 // pred_check_branch
      %14 = sbr.rel (0) target = $region5
    $region4: #{tpu_custom_call.1} parent=1 // pred_region
      %16 = vsyncadd [#allocation3], 0
      %s17 = sshll.u32 %s0, 4
      %s18 = int_to_ptr.hbm [resolvable:$true] %s17
      %s19 = sshll.u32 [#allocation2], 4
      %s20 = int_to_ptr.vmem [resolvable:$true] %s19
      %25 = dma.hbm_to_vmem [thread:$0]  %s18, 256, %s20, [#allocation3], 128, 128, 8
    $region5: #{tpu_custom_call.1} parent=1 // pred_fallthru
      _
    // Predicated region
    $region6: #{tpu_custom_call.1} parent=1 // pred_check
      _
    $region7: #{tpu_custom_call.1} parent=1 // pred_check_branch
      %27 = sbr.rel (0) target = $region9
    $region8: #{tpu_custom_call.1} parent=1 // pred_region
      %29 = vsyncadd [#allocation6], 0
      %s31 = sshll.u32 %s1, 4
      %s32 = int_to_ptr.hbm [resolvable:$true] %s31
      %s33 = sshll.u32 [#allocation5], 4
      %s34 = int_to_ptr.vmem [resolvable:$true] %s33
      %36 = dma.hbm_to_vmem [thread:$0]  %s32, 32, %s34, [#allocation6]
    $region9: #{tpu_custom_call.1} parent=1 // pred_fallthru
      _
    // Predicated region
    $region10: #{tpu_custom_call.1} parent=1 // pred_check
      _
    $region11: #{tpu_custom_call.1} parent=1 // pred_check_branch
      %38 = sbr.rel (0) target = $region13
    $region12: #{tpu_custom_call.1} parent=1 // pred_region
      _
    $region13: #{tpu_custom_call.1} parent=1 // pred_fallthru
      _
    // Predicated region
    $region14: #{tpu_custom_call.1} parent=1 // pred_check
      _
    $region15: #{tpu_custom_call.1} parent=1 // pred_check_branch
      %40 = sbr.rel (0) target = $region17
    $region16: #{tpu_custom_call.1} parent=1 // pred_region
      %42 = vsyncadd [#allocation6], 0
      %s43 = sshll.u32 %s3, 4
      %s44 = int_to_ptr.hbm [resolvable:$true] %s43
      %s45 = sshll.u32 [#allocation7], 4
      %s46 = int_to_ptr.vmem [resolvable:$true] %s45
      %51 = dma.hbm_to_vmem [thread:$0]  %s44, 512, %s46, [#allocation6], 128, 128, 8
    $region17: #{tpu_custom_call.1} parent=1 // pred_fallthru
      _
    // Predicated region
    $region18: #{tpu_custom_call.1} parent=1 // pred_check
      _
    $region19: #{tpu_custom_call.1} parent=1 // pred_check_branch
      %53 = sbr.rel (0) target = $region21
    $region20: #{tpu_custom_call.1} parent=1 // pred_region
      _
    $region21: #{tpu_custom_call.1} parent=1 // pred_fallthru
      _
    // Predicated region
    $region22: #{tpu_custom_call.1} parent=1 // pred_check
      _
    $region23: #{tpu_custom_call.1} parent=1 // pred_check_branch
      %55 = sbr.rel (0) target = $region25
    $region24: #{tpu_custom_call.1} parent=1 // pred_region
      %57 = dma.done [#allocation3], 256
    $region25: #{tpu_custom_call.1} parent=1 // pred_fallthru
      _
    // Predicated region
    $region26: #{tpu_custom_call.1} parent=1 // pred_check
      _
    $region27: #{tpu_custom_call.1} parent=1 // pred_check_branch
      %59 = sbr.rel (0) target = $region29
    $region28: #{tpu_custom_call.1} parent=1 // pred_region
      %61 = dma.done [#allocation6], 32
    $region29: #{tpu_custom_call.1} parent=1 // pred_fallthru
      _
    // Predicated region
    $region30: #{tpu_custom_call.1} parent=1 // pred_check
      _
    $region31: #{tpu_custom_call.1} parent=1 // pred_check_branch
      %63 = sbr.rel (0) target = $region33
    $region32: #{tpu_custom_call.1} parent=1 // pred_region
      %65 = dma.done [#allocation6], 512
    $region33: #{tpu_custom_call.1} parent=1 // pred_fallthru
      _
    %v66 = vld [vmem:[#allocation2] sm:$0xff]
    %v67 = vld [vmem:[#allocation2 + $0x8] sm:$0xff]
    %v68 = vld [vmem:[#allocation5] sm:$0x3]
    %v69 = vld [vmem:[%s2] sm:$0x1]
    %v71 = vperm.slane %v69, 0
    %v73 = vmul.f32 %v66, %v71
    %v74 = vmul.f32 %v67, %v71
    %vm75 = vcmask 261120
    %v76 = vsel %vm75, %v73, 0.0
    %77 = vadd.xlane.f32.xlu0 %v76
    %v78 = vpop.xlane.xlu0 %77
    %v79 = vsel %vm75, %v74, 0.0
    %80 = vadd.xlane.f32.xlu0 %v79
    %v81 = vpop.xlane.xlu0 %80
    %vm82 = vcmp.gt.f32.partialorder %v68, 0.0
    %v85 = vlaneseq
    %v86 = vand.u32 %v85, 127
    %v87 = vperm.slane %v78, %v86
    %v88 = vperm.slane %v81, %v86
    %vm89 = vcmask 1041409
    %v90 = vsel %vm89, %v88, %v87
    %v92 = vsel %vm82, %v90, -1e+09
    %vm93 = vcmask 58368
    %v94 = vsel %vm93, %v92, -inf
    %95 = vmax.xlane.f32.xlu0 %v94
    %v96 = vpop.xlane.xlu0 %95
    %v97 = vsub.f32 %v92, %v96
    %v98 = vmul.f32 %v97, 1.442695
    %v99 = vpow.pop %v98
    %v100 = vsel %vm93, %v99, 0.0
    %101 = vadd.xlane.f32.xlu0 %v100
    %v102 = vpop.xlane.xlu0 %101
    %v103 = vrcp.pop %v102
    %v104 = vmul.f32 %v102, %v103
    %v105 = vsub.f32 1.0, %v104
    %v106 = vmul.f32 %v103, %v105
    %v107 = vadd.f32 %v103, %v106
    %vm108 = vweird.f32 %v102
    %vm109 = vweird.f32 %v103
    %vm110 = vmor %vm108, %vm109
    %v111 = vsel %vm110, %v103, %v107
    %v112 = vand.u32 2147483647, %v102
    %vm113 = vcmp.eq.f32.partialorder %v112, 8.507059e+37
    %v114 = vand.u32 %v102, 2147483648
    %v115 = vor.u32 1.1754944e-38, %v114
    %v116 = vsel %vm113, %v115, %v111
    %v117 = vmul.f32 %v99, %v116
    %v119 = vrot.slane %v117, 1
    %vm120 = vcmask 64512
    %v121 = vsel %vm120, %v117, 0
    %123 = vmatpush.msra.mxu0 0.0
    %124 = vmatpush.msra.mxu0 0.0
    %125 = vmatpush.msra.mxu0 0.0
    %126 = vmatpush.msra.mxu0 0.0
    %127 = vmatpush.msra.mxu0 0.0
    %128 = vmatpush.msra.mxu0 0.0
    %129 = vmatpush.msra.mxu0 0.0
    %130 = vmatpush.msra.mxu0 0.0
    %131 = vmatpush.msra.mxu0 0.0
    %132 = vmatpush.msra.mxu0 0.0
    %133 = vmatpush.msra.mxu0 0.0
    %134 = vmatpush.msra.mxu0 0.0
    %135 = vmatpush.msra.mxu0 0.0
    %136 = vmatpush.msra.mxu0 0.0
    %137 = vmatpush.msra.mxu0 0.0
    %138 = vmatpush.msra.mxu0 %v66
    %139 = vmatmul.f32.gmra.mxu0 %v121
    %v140 = vpop.f32.mrf.mxu0
    %v141 = vadd.f32 0.0, %v140
    %142 = vdwg.mxu0
    %v143 = vsel %vm120, %v119, 0
    %145 = vmatpush.msra.mxu0 0.0
    %146 = vmatpush.msra.mxu0 0.0
    %147 = vmatpush.msra.mxu0 0.0
    %148 = vmatpush.msra.mxu0 0.0
    %149 = vmatpush.msra.mxu0 0.0
    %150 = vmatpush.msra.mxu0 0.0
    %151 = vmatpush.msra.mxu0 0.0
    %152 = vmatpush.msra.mxu0 0.0
    %153 = vmatpush.msra.mxu0 0.0
    %154 = vmatpush.msra.mxu0 0.0
    %155 = vmatpush.msra.mxu0 0.0
    %156 = vmatpush.msra.mxu0 0.0
    %157 = vmatpush.msra.mxu0 0.0
    %158 = vmatpush.msra.mxu0 0.0
    %159 = vmatpush.msra.mxu0 0.0
    %160 = vmatpush.msra.mxu0 %v67
    %161 = vmatmul.f32.gmra.mxu0 %v143
    %v162 = vpop.f32.mrf.mxu0
    %v163 = vadd.f32 0.0, %v162
    %164 = vdwg.mxu0
    %v165 = vld [vmem:[#allocation7] sm:$0xff]
    %v166 = vld [vmem:[#allocation7 + $0x8] sm:$0xff]
    %v167 = vld [vmem:[#allocation7 + $0x10] sm:$0xff]
    %v168 = vld [vmem:[#allocation7 + $0x18] sm:$0xff]
    %v169 = vld [vmem:[%s4] sm:$0x1]
    %v171 = vperm.slane %v169, 0
    %v175 = vrot.slane %v163, 7
    %v176 = vsel %vm89, %v175, %v141
    %v177 = vsel %vm75, %v176, 0
    %179 = vmatpush.msra.mxu0 0.0
    %180 = vmatpush.msra.mxu0 0.0
    %181 = vmatpush.msra.mxu0 0.0
    %182 = vmatpush.msra.mxu0 0.0
    %183 = vmatpush.msra.mxu0 0.0
    %184 = vmatpush.msra.mxu0 0.0
    %185 = vmatpush.msra.mxu0 0.0
    %186 = vmatpush.msra.mxu0 0.0
    %187 = vmatpush.msra.mxu0 0.0
    %188 = vmatpush.msra.mxu0 0.0
    %189 = vmatpush.msra.mxu0 0.0
    %190 = vmatpush.msra.mxu0 0.0
    %191 = vmatpush.msra.mxu0 %v168
    %192 = vmatpush.msra.mxu0 %v167
    %193 = vmatpush.msra.mxu0 %v166
    %194 = vmatpush.msra.mxu0 %v165
    %195 = vmatmul.f32.gmra.mxu0 %v177
    %v196 = vpop.f32.mrf.mxu0
    %v197 = vadd.f32 %v171, %v196
    %198 = vdwg.mxu0
    %vm199 = vcmask 254976
    %200 = vst.msk [vmem:[#allocation8] sm:$0x3] %vm199, %v197
    // Predicated region
    $region34: #{tpu_custom_call.1} parent=1 // pred_check
      _
    $region35: #{tpu_custom_call.1} parent=1 // pred_check_branch
      %202 = sbr.rel (0) target = $region37
    $region36: #{tpu_custom_call.1} parent=1 // pred_region
      %204 = vsyncadd [#allocation4], 0
      %s206 = sshll.u32 [#allocation8], 4
      %s207 = int_to_ptr.vmem [resolvable:$true] %s206
      %s208 = sshll.u32 %s5, 4
      %s209 = int_to_ptr.hbm [resolvable:$true] %s208
      %211 = dma.vmem_to_hbm [thread:$0]  %s207, 32, %s209, [#allocation4]
    $region37: #{tpu_custom_call.1} parent=1 // pred_fallthru
      _
    // Predicated region
    $region38: #{tpu_custom_call.1} parent=1 // pred_check
      _
    $region39: #{tpu_custom_call.1} parent=1 // pred_check_branch
      %213 = sbr.rel (0) target = $region41
    $region40: #{tpu_custom_call.1} parent=1 // pred_region
      %215 = dma.done [#allocation4], 32
    $region41: #{tpu_custom_call.1} parent=1 // pred_fallthru
      _
    %216 = vsyncpa [#allocation3], 1
    %217 = vsyncpa [#allocation6], 1
    %218 = vsyncpa [#allocation4], 1

// kernel: tpu_custom_call.1
$region0: #{tpu_custom_call.1}
  #allocation0 [shape = 'u32[]', space=smem, size = 0x4, offset = 0x4, fixed_abs, tag = 'smem constant byte address 0x4 - core index']
  #allocation1 [shape = 'u32[72,128]{1,0:T(1,128)}', space=vmem, size = 0x9000, scoped, tag = 'internal scratch']
  %s0 = inlined_call_operand.hbm [shape: f32[2,8,32], index: 0, kind: input, shape index: {}]
  %s1 = inlined_call_operand.hbm [shape: f32[2,8], index: 1, kind: input, shape index: {}]
  %s2 = inlined_call_operand.vmem [shape: f32[1,32], index: 2, kind: input, shape index: {}]
  %s3 = inlined_call_operand.hbm [shape: f32[32,32], index: 3, kind: input, shape index: {}]
  %s4 = inlined_call_operand.vmem [shape: f32[1,32], index: 4, kind: input, shape index: {}]
  %s5 = inlined_call_operand.hbm [shape: f32[2,32], index: 5, kind: output, shape index: {}]
  %s6 = sld [smem:[#allocation0]]
  $region42: #{tpu_custom_call.1} parent=0
    _
  %s8 = ssub.s32 1, %s6
  %s9 = scalar_select 0, %s8, %s6
  $region1: #{tpu_custom_call.1} parent=0
    #allocation2 [shape = 'u8[8192]{0}', space=vmem, size = 0x2000, scoped, tag = 'input window, operand 0, single buffered']
    #allocation3 [shape = 's32[1]{0}', space=sflag, size = 0x4, scoped, tag = 'scoped memory for tpu_custom_call.1']
    #allocation4 [shape = 's32[1]{0}', space=sflag, size = 0x4, scoped, tag = 'scoped memory for tpu_custom_call.1']
    #allocation5 [shape = 'u8[1024]{0}', space=vmem, size = 0x400, scoped, tag = 'input window, operand 1, single buffered']
    #allocation6 [shape = 's32[1]{0}', space=sflag, size = 0x4, scoped, tag = 'scoped memory for tpu_custom_call.1']
    #allocation7 [shape = 'u8[16384]{0}', space=vmem, size = 0x4000, scoped, tag = 'input window, operand 3, single buffered']
    #allocation8 [shape = 'u8[1024]{0}', space=vmem, size = 0x400, scoped, tag = 'output window, operand 0, single buffered']
    %10 = vsyncpa [#allocation3], 0
    %11 = vsyncpa [#allocation6], 0
    %12 = vsyncpa [#allocation4], 0
    // Predicated region
    $region2: #{tpu_custom_call.1} parent=1 // pred_check
      _
    $region3: #{tpu_custom_call.1} parent=1 // pred_check_branch
      %14 = sbr.rel (0) target = $region5
    $region4: #{tpu_custom_call.1} parent=1 // pred_region
      %16 = vsyncadd [#allocation3], 0
      %s17 = sshll.u32 %s0, 4
      %s18 = int_to_ptr.hbm [resolvable:$true] %s17
      %s19 = sshll.u32 [#allocation2], 4
      %s20 = int_to_ptr.vmem [resolvable:$true] %s19
      %25 = dma.hbm_to_vmem [thread:$0]  %s18, 256, %s20, [#allocation3], 128, 128, 8
    $region5: #{tpu_custom_call.1} parent=1 // pred_fallthru
      _
    // Predicated region
    $region6: #{tpu_custom_call.1} parent=1 // pred_check
      _
    $region7: #{tpu_custom_call.1} parent=1 // pred_check_branch
      %27 = sbr.rel (0) target = $region9
    $region8: #{tpu_custom_call.1} parent=1 // pred_region
      %29 = vsyncadd [#allocation6], 0
      %s31 = sshll.u32 %s1, 4
      %s32 = int_to_ptr.hbm [resolvable:$true] %s31
      %s33 = sshll.u32 [#allocation5], 4
      %s34 = int_to_ptr.vmem [resolvable:$true] %s33
      %36 = dma.hbm_to_vmem [thread:$0]  %s32, 32, %s34, [#allocation6]
    $region9: #{tpu_custom_call.1} parent=1 // pred_fallthru
      _
    // Predicated region
    $region10: #{tpu_custom_call.1} parent=1 // pred_check
      _
    $region11: #{tpu_custom_call.1} parent=1 // pred_check_branch
      %38 = sbr.rel (0) target = $region13
    $region12: #{tpu_custom_call.1} parent=1 // pred_region
      _
    $region13: #{tpu_custom_call.1} parent=1 // pred_fallthru
      _
    // Predicated region
    $region14: #{tpu_custom_call.1} parent=1 // pred_check
      _
    $region15: #{tpu_custom_call.1} parent=1 // pred_check_branch
      %40 = sbr.rel (0) target = $region17
    $region16: #{tpu_custom_call.1} parent=1 // pred_region
      %42 = vsyncadd [#allocation6], 0
      %s43 = sshll.u32 %s3, 4
      %s44 = int_to_ptr.hbm [resolvable:$true] %s43
      %s45 = sshll.u32 [#allocation7], 4
      %s46 = int_to_ptr.vmem [resolvable:$true] %s45
      %51 = dma.hbm_to_vmem [thread:$0]  %s44, 512, %s46, [#allocation6], 128, 128, 8
    $region17: #{tpu_custom_call.1} parent=1 // pred_fallthru
      _
    // Predicated region
    $region18: #{tpu_custom_call.1} parent=1 // pred_check
      _
    $region19: #{tpu_custom_call.1} parent=1 // pred_check_branch
      %53 = sbr.rel (0) target = $region21
    $region20: #{tpu_custom_call.1} parent=1 // pred_region
      _
    $region21: #{tpu_custom_call.1} parent=1 // pred_fallthru
      _
    // Predicated region
    $region22: #{tpu_custom_call.1} parent=1 // pred_check
      _
    $region23: #{tpu_custom_call.1} parent=1 // pred_check_branch
      %55 = sbr.rel (0) target = $region25
    $region24: #{tpu_custom_call.1} parent=1 // pred_region
      %57 = dma.done [#allocation3], 256
    $region25: #{tpu_custom_call.1} parent=1 // pred_fallthru
      _
    // Predicated region
    $region26: #{tpu_custom_call.1} parent=1 // pred_check
      _
    $region27: #{tpu_custom_call.1} parent=1 // pred_check_branch
      %59 = sbr.rel (0) target = $region29
    $region28: #{tpu_custom_call.1} parent=1 // pred_region
      %61 = dma.done [#allocation6], 32
    $region29: #{tpu_custom_call.1} parent=1 // pred_fallthru
      _
    // Predicated region
    $region30: #{tpu_custom_call.1} parent=1 // pred_check
      _
    $region31: #{tpu_custom_call.1} parent=1 // pred_check_branch
      %63 = sbr.rel (0) target = $region33
    $region32: #{tpu_custom_call.1} parent=1 // pred_region
      %65 = dma.done [#allocation6], 512
    $region33: #{tpu_custom_call.1} parent=1 // pred_fallthru
      _
    %v66 = vld [vmem:[#allocation2] sm:$0xff]
    %v67 = vld [vmem:[#allocation2 + $0x8] sm:$0xff]
    %v68 = vld [vmem:[#allocation5] sm:$0x3]
    %v69 = vld [vmem:[%s2] sm:$0x1]
    %v71 = vperm.slane %v69, 0
    %v73 = vmul.f32 %v66, %v71
    %v74 = vmul.f32 %v67, %v71
    %vm75 = vcmask 261120
    %v76 = vsel %vm75, %v73, 0.0
    %77 = vadd.xlane.f32.xlu0 %v76
    %v78 = vpop.xlane.xlu0 %77
    %v79 = vsel %vm75, %v74, 0.0
    %80 = vadd.xlane.f32.xlu0 %v79
    %v81 = vpop.xlane.xlu0 %80
    %vm82 = vcmp.gt.f32.partialorder %v68, 0.0
    %v85 = vlaneseq
    %v86 = vand.u32 %v85, 127
    %v87 = vperm.slane %v78, %v86
    %v88 = vperm.slane %v81, %v86
    %vm89 = vcmask 1041409
    %v90 = vsel %vm89, %v88, %v87
    %v92 = vsel %vm82, %v90, -1e+09
    %vm93 = vcmask 58368
    %v94 = vsel %vm93, %v92, -inf
    %95 = vmax.xlane.f32.xlu0 %v94
    %v96 = vpop.xlane.xlu0 %95
    %v97 = vsub.f32 %v92, %v96
    %v98 = vmul.f32 %v97, 1.442695
    %v99 = vpow.pop %v98
    %v100 = vsel %vm93, %v99, 0.0
    %101 = vadd.xlane.f32.xlu0 %v100
    %v102 = vpop.xlane.xlu0 %101
    %v103 = vrcp.pop %v102
    %v104 = vmul.f32 %v102, %v103
    %v105 = vsub.f32 1.0, %v104
    %v106 = vmul.f32 %v103, %v105
    %v107 = vadd.f32 %v103, %v106
    %vm108 = vweird.f32 %v102
    %vm109 = vweird.f32 %v103
    %vm110 = vmor %vm108, %vm109
    %v111 = vsel %vm110, %v103, %v107
    %v112 = vand.u32 2147483647, %v102
    %vm113 = vcmp.eq.f32.partialorder %v112, 8.507059e+37
    %v114 = vand.u32 %v102, 2147483648
    %v115 = vor.u32 1.1754944e-38, %v114
    %v116 = vsel %vm113, %v115, %v111
    %v117 = vmul.f32 %v99, %v116
    %v118 = vperm.slane %v117, 0
    %v119 = vlaneseq
    %v120 = vshrl.u32 %v119, 7
    %122 = vset.pattern.permute.xlu0 %v120
    %123 = vperm.xlu0 %122, %v118
    %v124 = vpop.permute.xlu0 %123
    %v125 = vperm.slane %v117, 1
    %v126 = vlaneseq
    %v127 = vshrl.u32 %v126, 7
    %129 = vset.pattern.permute.xlu0 %v127
    %130 = vperm.xlu0 %129, %v125
    %v131 = vpop.permute.xlu0 %130
    %v132 = vmul.f32 %v124, %v66
    %v133 = vmul.f32 %v131, %v67
    %v134 = vsel %vm75, %v132, 0.0
    %v135 = vrot.slane %v134, 4
    %v136 = vadd.f32 %v134, %v135
    %v137 = vrot.slane %v136, 2
    %v138 = vadd.f32 %v136, %v137
    %v139 = vrot.slane %v138, 1
    %v140 = vadd.f32 %v138, %v139
    %v141 = vsel %vm75, %v133, 0.0
    %v142 = vrot.slane %v141, 4
    %v143 = vadd.f32 %v141, %v142
    %v144 = vrot.slane %v143, 2
    %v145 = vadd.f32 %v143, %v144
    %v146 = vrot.slane %v145, 1
    %v147 = vadd.f32 %v145, %v146
    %v148 = vld [vmem:[#allocation7] sm:$0xff]
    %v149 = vld [vmem:[#allocation7 + $0x8] sm:$0xff]
    %v150 = vld [vmem:[#allocation7 + $0x10] sm:$0xff]
    %v151 = vld [vmem:[#allocation7 + $0x18] sm:$0xff]
    %v152 = vld [vmem:[%s4] sm:$0x1]
    %v154 = vperm.slane %v152, 0
    %v158 = vsel %vm89, %v147, %v140
    %v159 = vsel %vm75, %v158, 0
    %161 = vmatpush.msra.mxu0 0.0
    %162 = vmatpush.msra.mxu0 0.0
    %163 = vmatpush.msra.mxu0 0.0
    %164 = vmatpush.msra.mxu0 0.0
    %165 = vmatpush.msra.mxu0 0.0
    %166 = vmatpush.msra.mxu0 0.0
    %167 = vmatpush.msra.mxu0 0.0
    %168 = vmatpush.msra.mxu0 0.0
    %169 = vmatpush.msra.mxu0 0.0
    %170 = vmatpush.msra.mxu0 0.0
    %171 = vmatpush.msra.mxu0 0.0
    %172 = vmatpush.msra.mxu0 0.0
    %173 = vmatpush.msra.mxu0 %v151
    %174 = vmatpush.msra.mxu0 %v150
    %175 = vmatpush.msra.mxu0 %v149
    %176 = vmatpush.msra.mxu0 %v148
    %177 = vmatmul.f32.gmra.mxu0 %v159
    %v178 = vpop.f32.mrf.mxu0
    %v179 = vadd.f32 %v154, %v178
    %180 = vdwg.mxu0
    %vm181 = vcmask 254976
    %182 = vst.msk [vmem:[#allocation8] sm:$0x3] %vm181, %v179
    // Predicated region
    $region34: #{tpu_custom_call.1} parent=1 // pred_check
      _
    $region35: #{tpu_custom_call.1} parent=1 // pred_check_branch
      %184 = sbr.rel (0) target = $region37
    $region36: #{tpu_custom_call.1} parent=1 // pred_region
      %186 = vsyncadd [#allocation4], 0
      %s188 = sshll.u32 [#allocation8], 4
      %s189 = int_to_ptr.vmem [resolvable:$true] %s188
      %s190 = sshll.u32 %s5, 4
      %s191 = int_to_ptr.hbm [resolvable:$true] %s190
      %193 = dma.vmem_to_hbm [thread:$0]  %s189, 32, %s191, [#allocation4]
    $region37: #{tpu_custom_call.1} parent=1 // pred_fallthru
      _
    // Predicated region
    $region38: #{tpu_custom_call.1} parent=1 // pred_check
      _
    $region39: #{tpu_custom_call.1} parent=1 // pred_check_branch
      %195 = sbr.rel (0) target = $region41
    $region40: #{tpu_custom_call.1} parent=1 // pred_region
      %197 = dma.done [#allocation4], 32
    $region41: #{tpu_custom_call.1} parent=1 // pred_fallthru
      _
    %198 = vsyncpa [#allocation3], 1
    %199 = vsyncpa [#allocation6], 1
    %200 = vsyncpa [#allocation4], 1

</llo_original>
